<compile_context>
chip_gen: v6e
topology: v6e:2x2x1
jax: 0.10.0
libtpu: 0.0.40
codegen_flags: <defaults>
</compile_context>

<pallas_src>
import functools
import math

import jax
import jax.numpy as jnp
from jax import lax
from jax.experimental import pallas as pl
from jax.experimental.pallas import tpu as pltpu


# ----------------------------------------------------------------------------
# Parameter initialization (deterministic, xavier-normal-ish / linear-uniform)
# ----------------------------------------------------------------------------
def init_params(key, input_size, hidden_size, embedding_dim):
    I, L, E = input_size, hidden_size, embedding_dim
    ks = jax.random.split(key, 12)

    def xavier(k, shape, fan_in, fan_out):
        std = math.sqrt(2.0 / (fan_in + fan_out))
        return std * jax.random.normal(k, shape, dtype=jnp.float32)

    p = {}
    # MultiLinear weights (L, I, E), biases (L, E)
    p["w_o"] = xavier(ks[0], (L, I, E), I * E, L * E)
    p["b_o"] = xavier(ks[1], (L, E), E, L)
    p["w_v"] = xavier(ks[2], (L, I, E), I * E, L * E)
    p["b_v"] = xavier(ks[3], (L, E), E, L)
    p["w_k"] = xavier(ks[4], (L, I, E), I * E, L * E)
    p["b_k"] = xavier(ks[5], (L, E), E, L)
    p["w_q"] = xavier(ks[6], (L, I, E), I * E, L * E)
    p["b_q"] = xavier(ks[7], (L, E), E, L)
    # nn.Linear(input_size, hidden_size): weight (L, I), bias (L,)
    bound = 1.0 / math.sqrt(I)
    p["w_f"] = jax.random.uniform(ks[8], (L, I), jnp.float32, -bound, bound)
    p["bias_f"] = jax.random.uniform(ks[9], (L,), jnp.float32, -bound, bound)
    p["w_i"] = jax.random.uniform(ks[10], (L, I), jnp.float32, -bound, bound)
    p["bias_i"] = jax.random.uniform(ks[11], (L,), jnp.float32, -bound, bound)
    return p


def _cdiv(a, b):
    return -(-a // b)


def _round_up(a, b):
    return _cdiv(a, b) * b


def _chunking(T, max_chunk):
    """Chunk length S (multiple of 8, <= ~max_chunk) and padded T."""
    n_chunks = max(1, _cdiv(T, max_chunk))
    S = _round_up(_cdiv(T, n_chunks), 8)
    return S, n_chunks, S * n_chunks


# ----------------------------------------------------------------------------
# Pallas kernel
# ----------------------------------------------------------------------------
def make_xlstm_kernel(T, I, E, S, n_chunks, inv_scale):
    last_local = (T - 1) - (n_chunks - 1) * S     # last valid row in last chunk

    def kernel(x_ref, g_ref, wm_ref, bm_ref, wqo_ref, bqo_ref,
               h_ref, c_ref, mu_ref, n_ref):
        c = pl.program_id(2)

        # ---- init recurrent state at the first chunk of each (b, l) ----
        @pl.when(c == 0)
        def _():
            mu_ref[...] = jnp.zeros_like(mu_ref)
            n_ref[...] = jnp.zeros_like(n_ref)
            c_ref[...] = jnp.zeros_like(c_ref)

        # ---- fused value/key projection of the whole chunk (one MXU matmul)
        P = jnp.dot(x_ref[0], wm_ref[0],
                    preferred_element_type=jnp.float32) + bm_ref[0]   # (S, 2E) f32
        V = P[:, 0:E]                                                 # (S, E)
        K = P[:, E:2 * E]                                             # (S, E)

        # ---- chunkwise stabilized mLSTM update (scalars/vectors in f32) ----
        # g_t = i_t - cumsum(f)_t (global, precomputed); mu = m_t - cumsum(f)_t
        g = g_ref[0, 0]                                               # (S, 1)
        mu_old = mu_ref[...]                                          # (1, 1)
        mu_new = jnp.maximum(mu_old, jnp.max(g, axis=0, keepdims=True))
        decay = jnp.exp(mu_old - mu_new)                              # (1, 1)
        w_t = jnp.exp(g - mu_new)                                     # (S, 1)
        Kw = K * (w_t * inv_scale)                                    # (S, E) f32

        # all S rank-1 outer products in one MXU matmul (bf16 in, f32 acc),
        # contracting axis 0 of both operands so no V.T is materialized
        dC = lax.dot_general(
            V.astype(jnp.bfloat16), Kw.astype(jnp.bfloat16),
            dimension_numbers=(((0,), (0,)), ((), ())),
            preferred_element_type=jnp.float32)                       # (E, E)

        c_ref[0, 0, :, :] = decay * c_ref[0, 0, :, :] + dC
        n_ref[...] = decay * n_ref[...] + jnp.sum(Kw, axis=0, keepdims=True)
        mu_ref[...] = mu_new

        # ---- only the last hidden state is returned: q/o projection once ----
        @pl.when(c == n_chunks - 1)
        def _():
            x_last = x_ref[0, last_local:last_local + 1, :]           # (1, I)
            P2 = jnp.dot(x_last, wqo_ref[0],
                         preferred_element_type=jnp.float32) + bqo_ref[0]  # (1, 2E)
            q = P2[:, 0:E]
            o = jax.nn.sigmoid(P2[:, E:2 * E])
            C_f = c_ref[0, 0, :, :]                                   # (E, E) f32
            cq = jnp.dot(q, C_f, preferred_element_type=jnp.float32)  # (1, E)
            denom = jnp.maximum(
                jnp.sum(n_ref[...] * q, axis=-1, keepdims=True), 1.0)
            h_ref[0, 0, :, :] = o * cq / denom

    return kernel


@functools.partial(jax.jit, static_argnames=("max_chunk",))
def xlstm_pallas(x, p, max_chunk=256):
    B, T, I = x.shape
    L, _, E = p["w_o"].shape
    S, n_chunks, T_pad = _chunking(T, max_chunk)
    inv_scale = 1.0 / math.sqrt(L)            # torch: math.sqrt(hidden_size)

    # fused [v | k] and [q | o] projection slabs (bf16 operands, f32 bias)
    w_main = jnp.concatenate([p["w_v"], p["w_k"]], axis=-1).astype(jnp.bfloat16)
    b_main = jnp.concatenate([p["b_v"], p["b_k"]], axis=-1)[:, None, :]
    w_qo = jnp.concatenate([p["w_q"], p["w_o"]], axis=-1).astype(jnp.bfloat16)
    b_qo = jnp.concatenate([p["b_q"], p["b_o"]], axis=-1)[:, None, :]

    # forget/input gates + cumulative forget sum: tiny (B,T,L), done in plain
    # XLA (fused) so the kernel carries no in-kernel prefix scan / tri matmul.
    hp = lax.Precision.HIGHEST
    f_all = jnp.einsum("bti,li->btl", x, p["w_f"], precision=hp) + p["bias_f"]
    i_all = jnp.einsum("bti,li->btl", x, p["w_i"], precision=hp) + p["bias_i"]
    g_all = i_all - jnp.cumsum(f_all, axis=1)                 # (B, T, L) f32
    g_all = jnp.transpose(g_all, (0, 2, 1))[..., None]        # (B, L, T, 1)

    x_bf = x.astype(jnp.bfloat16)
    if T_pad != T:
        # padded steps: zero x rows (harmless) and g = -inf so they contribute
        # nothing to the state and do not change the stabilizer.
        x_bf = jnp.pad(x_bf, ((0, 0), (0, T_pad - T), (0, 0)))
        g_all = jnp.pad(g_all, ((0, 0), (0, 0), (0, T_pad - T), (0, 0)),
                        constant_values=-1e30)

    kernel = make_xlstm_kernel(T, I, E, S, n_chunks, inv_scale)

    hidden4, cell = pl.pallas_call(
        kernel,
        grid=(B, L, n_chunks),
        in_specs=[
            pl.BlockSpec((1, S, I), lambda b, l, c: (b, c, 0)),        # x chunk
            pl.BlockSpec((1, 1, S, 1), lambda b, l, c: (b, l, c, 0)),  # g chunk
            pl.BlockSpec((1, I, 2 * E), lambda b, l, c: (l, 0, 0)),    # [v|k] W
            pl.BlockSpec((1, 1, 2 * E), lambda b, l, c: (l, 0, 0)),    # [v|k] b
            pl.BlockSpec((1, I, 2 * E), lambda b, l, c: (l, 0, 0)),    # [q|o] W
            pl.BlockSpec((1, 1, 2 * E), lambda b, l, c: (l, 0, 0)),    # [q|o] b
        ],
        out_specs=(
            pl.BlockSpec((1, 1, 1, E), lambda b, l, c: (b, l, 0, 0)),
            pl.BlockSpec((1, 1, E, E), lambda b, l, c: (b, l, 0, 0)),
        ),
        out_shape=(
            jax.ShapeDtypeStruct((B, L, 1, E), jnp.float32),
            # NOTE: keep cell in f32 to match the reference; on v5e the E^2
            # writeback could be emitted as bf16 if the caller allows it.
            jax.ShapeDtypeStruct((B, L, E, E), jnp.float32),
        ),
        scratch_shapes=[
            pltpu.VMEM((1, 1), jnp.float32),   # running max  mu = m - cumsum(f)
            pltpu.VMEM((1, E), jnp.float32),   # normalizer n (stabilized)
        ],
        # VMEM use per step is small (chunked x + one layer's weights), so the
        # default scoped VMEM limit is sufficient on v5e/v6e/v7x.
        compiler_params=pltpu.CompilerParams(
            dimension_semantics=("parallel", "parallel", "arbitrary")),
    )(x_bf, g_all, w_main, b_main, w_qo, b_qo)
    return hidden4.reshape(B, L, E), cell


# ----------------------------------------------------------------------------
# Pure-JAX reference (mirrors the PyTorch forward exactly, in f32)
# ----------------------------------------------------------------------------
def xlstm_reference(x, p):
    B, T, I = x.shape
    L, _, E = p["w_o"].shape
    scale = math.sqrt(L)
    hp = lax.Precision.HIGHEST

    h = jnp.zeros((B, L, E), jnp.float32)
    c = jnp.zeros((B, L, E, E), jnp.float32)
    m = jnp.zeros((B, L), jnp.float32)
    n = jnp.zeros((B, L, E), jnp.float32)
    ml = lambda xt, w, b: jnp.einsum("bi,lij->blj", xt, w, precision=hp) + b
    for t in range(T):
        xt = x[:, t, :]
        o = jax.nn.sigmoid(ml(xt, p["w_o"], p["b_o"]))
        f_ = jnp.dot(xt, p["w_f"].T, precision=hp) + p["bias_f"]
        i_ = jnp.dot(xt, p["w_i"].T, precision=hp) + p["bias_i"]
        v = ml(xt, p["w_v"], p["b_v"])
        k = ml(xt, p["w_k"], p["b_k"]) / scale
        q = ml(xt, p["w_q"], p["b_q"])
        m_new = jnp.maximum(f_ + m, i_)
        ig = jnp.exp(i_ - m_new)
        fg = jnp.exp(f_ + m - m_new)
        m = m_new
        c = fg[:, :, None, None] * c + ig[:, :, None, None] * jnp.einsum(
            "bli,blj->blij", v, k, precision=hp)
        n = fg[:, :, None] * n + ig[:, :, None] * k
        denom = jnp.maximum(jnp.sum(n * q, axis=-1), 1.0)[:, :, None]
        h = o * jnp.einsum("blij,bli->blj", c, q, precision=hp) / denom
    return h, c


if __name__ == "__main__":
    input_size, hidden_size, embedding_dim = 4, 4, 8
    key = jax.random.PRNGKey(0)
    kx, kp, kx2 = jax.random.split(key, 3)
    params = init_params(kp, input_size, hidden_size, embedding_dim)

    # --- case 1: module-sized input, single chunk -------------------------
    B, T = 2, 8
    x = jax.random.normal(kx, (B, T, input_size), dtype=jnp.float32)
    hidden, cell = xlstm_pallas(x, params)
    jax.block_until_ready((hidden, cell))
    assert hidden.shape == (B, hidden_size, embedding_dim)
    assert cell.shape == (B, hidden_size, embedding_dim, embedding_dim)
    h_exp, c_exp = xlstm_reference(x, params)
    assert jnp.allclose(hidden, h_exp, atol=2e-2, rtol=2e-2), "hidden mismatch"
    assert jnp.allclose(cell, c_exp, atol=2e-2, rtol=2e-2), "cell mismatch"

    # --- case 2: longer sequence forcing multiple chunks + time padding ---
    B2, T2 = 2, 40
    x2 = jax.random.normal(kx2, (B2, T2, input_size), dtype=jnp.float32)
    hidden2, cell2 = xlstm_pallas(x2, params, max_chunk=16)   # 3 chunks of 16
    jax.block_until_ready((hidden2, cell2))
    h_exp2, c_exp2 = xlstm_reference(x2, params)
    assert jnp.allclose(hidden2, h_exp2, atol=2e-2, rtol=2e-2), "hidden mismatch (chunked)"
    assert jnp.allclose(cell2, c_exp2, atol=2e-2, rtol=2e-2), "cell mismatch (chunked)"

    print("KERNEL_OK")
</pallas_src>

<mosaic_0001>
module attributes {stable_mosaic.version = 11 : i64} {
  func.func @kernel(%arg0: i32, %arg1: i32, %arg2: i32, %arg3: memref<1x8x4xbf16, #tpu.memory_space<vmem>>, %arg4: memref<1x1x8x1xf32, #tpu.memory_space<vmem>>, %arg5: memref<1x4x16xbf16, #tpu.memory_space<vmem>>, %arg6: memref<1x1x16xf32, #tpu.memory_space<vmem>>, %arg7: memref<1x4x16xbf16, #tpu.memory_space<vmem>>, %arg8: memref<1x1x16xf32, #tpu.memory_space<vmem>>, %arg9: memref<1x1x1x8xf32, #tpu.memory_space<vmem>>, %arg10: memref<1x1x8x8xf32, #tpu.memory_space<vmem>>, %arg11: memref<1x1xf32, #tpu.memory_space<vmem>>, %arg12: memref<1x8xf32, #tpu.memory_space<vmem>>) attributes {dimension_semantics = [#tpu.dimension_semantics<parallel>, #tpu.dimension_semantics<parallel>, #tpu.dimension_semantics<arbitrary>], iteration_bounds = array<i64: 2, 4, 1>, scalar_prefetch = 0 : i64, scratch_operands = 2 : i64, tpu.core_type = #tpu.core_type<tc>, window_params = [{transform_indices = @transform_0, window_bounds = array<i64: 1, 8, 4>}, {transform_indices = @transform_1, window_bounds = array<i64: 1, 1, 8, 1>}, {transform_indices = @transform_2, window_bounds = array<i64: 1, 4, 16>}, {transform_indices = @transform_3, window_bounds = array<i64: 1, 1, 16>}, {transform_indices = @transform_4, window_bounds = array<i64: 1, 4, 16>}, {transform_indices = @transform_5, window_bounds = array<i64: 1, 1, 16>}, {transform_indices = @transform_6, window_bounds = array<i64: 1, 1, 1, 8>}, {transform_indices = @transform_7, window_bounds = array<i64: 1, 1, 8, 8>}]} {
    %c0_i32 = arith.constant 0 : i32
    %0 = arith.cmpi eq, %arg2, %c0_i32 : i32
    %1 = arith.extui %0 : i1 to i32
    %c0_i32_0 = arith.constant 0 : i32
    %2 = arith.cmpi ne, %1, %c0_i32_0 : i32
    scf.if %2 {
      %cst_35 = arith.constant 0.000000e+00 : f32
      %51 = vector.broadcast %cst_35 : f32 to vector<1x1xf32>
      %c0_36 = arith.constant 0 : index
      %c0_37 = arith.constant 0 : index
      %52 = vector.load %arg11[%c0_36, %c0_37] : memref<1x1xf32, #tpu.memory_space<vmem>>, vector<1x1xf32>
      tpu.vector_store %arg11[%c0_36, %c0_37], %51 {strides = array<i32>} : memref<1x1xf32, #tpu.memory_space<vmem>>, vector<1x1xf32>,
      %cst_38 = arith.constant 0.000000e+00 : f32
      %53 = vector.broadcast %cst_38 : f32 to vector<1x8xf32>
      %c0_39 = arith.constant 0 : index
      %c0_40 = arith.constant 0 : index
      %54 = vector.load %arg12[%c0_39, %c0_40] : memref<1x8xf32, #tpu.memory_space<vmem>>, vector<1x8xf32>
      tpu.vector_store %arg12[%c0_39, %c0_40], %53 {strides = array<i32>} : memref<1x8xf32, #tpu.memory_space<vmem>>, vector<1x8xf32>,
      %cst_41 = arith.constant 0.000000e+00 : f32
      %55 = vector.broadcast %cst_41 : f32 to vector<1x1x8x8xf32>
      %c0_42 = arith.constant 0 : index
      %c0_43 = arith.constant 0 : index
      %c0_44 = arith.constant 0 : index
      %c0_45 = arith.constant 0 : index
      %56 = vector.load %arg10[%c0_42, %c0_43, %c0_44, %c0_45] : memref<1x1x8x8xf32, #tpu.memory_space<vmem>>, vector<1x1x8x8xf32>
      tpu.vector_store %arg10[%c0_42, %c0_43, %c0_44, %c0_45], %55 {strides = array<i32>} : memref<1x1x8x8xf32, #tpu.memory_space<vmem>>, vector<1x1x8x8xf32>,
    } else {
    }
    %c0 = arith.constant 0 : index
    %c0_1 = arith.constant 0 : index
    %c0_2 = arith.constant 0 : index
    %3 = vector.load %arg3[%c0, %c0_1, %c0_2] : memref<1x8x4xbf16, #tpu.memory_space<vmem>>, vector<1x8x4xbf16>
    %4 = vector.shape_cast %3 : vector<1x8x4xbf16> to vector<8x4xbf16>
    %c0_3 = arith.constant 0 : index
    %c0_4 = arith.constant 0 : index
    %c0_5 = arith.constant 0 : index
    %5 = vector.load %arg5[%c0_3, %c0_4, %c0_5] : memref<1x4x16xbf16, #tpu.memory_space<vmem>>, vector<1x4x16xbf16>
    %6 = vector.shape_cast %5 : vector<1x4x16xbf16> to vector<4x16xbf16>
    %cst = arith.constant dense<0.000000e+00> : vector<8x16xf32>
    %7 = tpu.matmul %4, %6, %cst {dimension_numbers = #tpu.dot_dimension_numbers<[1], [0], [0], [1], [0, 0, 1, 1], [], []>} : vector<8x4xbf16>, vector<4x16xbf16>, vector<8x16xf32> -> vector<8x16xf32>
    %c0_6 = arith.constant 0 : index
    %c0_7 = arith.constant 0 : index
    %c0_8 = arith.constant 0 : index
    %8 = vector.load %arg6[%c0_6, %c0_7, %c0_8] : memref<1x1x16xf32, #tpu.memory_space<vmem>>, vector<1x1x16xf32>
    %9 = vector.shape_cast %8 : vector<1x1x16xf32> to vector<1x16xf32>
    %10 = vector.broadcast %9 : vector<1x16xf32> to vector<8x16xf32>
    %11 = arith.addf %7, %10 : vector<8x16xf32>
    %12 = vector.extract_strided_slice %11 {offsets = [0, 0], sizes = [8, 8], strides = [1, 1]} : vector<8x16xf32> to vector<8x8xf32>
    %13 = vector.extract_strided_slice %11 {offsets = [0, 8], sizes = [8, 8], strides = [1, 1]} : vector<8x16xf32> to vector<8x8xf32>
    %c0_9 = arith.constant 0 : index
    %c0_10 = arith.constant 0 : index
    %c0_11 = arith.constant 0 : index
    %c0_12 = arith.constant 0 : index
    %14 = vector.load %arg4[%c0_9, %c0_10, %c0_11, %c0_12] : memref<1x1x8x1xf32, #tpu.memory_space<vmem>>, vector<1x1x8x1xf32>
    %15 = vector.shape_cast %14 : vector<1x1x8x1xf32> to vector<8x1xf32>
    %c0_13 = arith.constant 0 : index
    %c0_14 = arith.constant 0 : index
    %16 = vector.load %arg11[%c0_13, %c0_14] : memref<1x1xf32, #tpu.memory_space<vmem>>, vector<1x1xf32>
    %cst_15 = arith.constant dense<0xFF800000> : vector<1xf32>
    %17 = vector.multi_reduction <maximumf>, %15, %cst_15 [0] : vector<8x1xf32> to vector<1xf32>
    %18 = vector.shape_cast %17 : vector<1xf32> to vector<1x1xf32>
    %19 = arith.maximumf %16, %18 : vector<1x1xf32>
    %20 = arith.subf %16, %19 : vector<1x1xf32>
    %21 = math.exp %20 : vector<1x1xf32>
    %22 = vector.broadcast %19 : vector<1x1xf32> to vector<8x1xf32>
    %23 = arith.subf %15, %22 : vector<8x1xf32>
    %24 = math.exp %23 : vector<8x1xf32>
    %cst_16 = arith.constant 5.000000e-01 : f32
    %25 = vector.broadcast %cst_16 : f32 to vector<8x1xf32>
    %26 = arith.mulf %24, %25 : vector<8x1xf32>
    %27 = vector.broadcast %26 : vector<8x1xf32> to vector<8x8xf32>
    %28 = arith.mulf %13, %27 : vector<8x8xf32>
    %29 = arith.truncf %12 : vector<8x8xf32> to vector<8x8xbf16>
    %30 = arith.truncf %28 : vector<8x8xf32> to vector<8x8xbf16>
    %cst_17 = arith.constant dense<0.000000e+00> : vector<8x8xf32>
    %31 = tpu.matmul %29, %30, %cst_17 {dimension_numbers = #tpu.dot_dimension_numbers<[0], [0], [1], [1], [0, 1, 1, 1], [], []>} : vector<8x8xbf16>, vector<8x8xbf16>, vector<8x8xf32> -> vector<8x8xf32>
    %c0_18 = arith.constant 0 : index
    %c0_19 = arith.constant 0 : index
    %c0_20 = arith.constant 0 : index
    %c0_21 = arith.constant 0 : index
    %32 = vector.load %arg10[%c0_18, %c0_19, %c0_20, %c0_21] : memref<1x1x8x8xf32, #tpu.memory_space<vmem>>, vector<1x1x8x8xf32>
    %33 = vector.shape_cast %32 : vector<1x1x8x8xf32> to vector<8x8xf32>
    %34 = vector.broadcast %21 : vector<1x1xf32> to vector<8x8xf32>
    %35 = arith.mulf %34, %33 : vector<8x8xf32>
    %36 = arith.addf %35, %31 : vector<8x8xf32>
    %c0_22 = arith.constant 0 : index
    %c0_23 = arith.constant 0 : index
    %c0_24 = arith.constant 0 : index
    %c0_25 = arith.constant 0 : index
    %37 = vector.load %arg10[%c0_22, %c0_23, %c0_24, %c0_25] : memref<1x1x8x8xf32, #tpu.memory_space<vmem>>, vector<1x1x8x8xf32>
    %38 = vector.shape_cast %37 : vector<1x1x8x8xf32> to vector<8x8xf32>
    %39 = vector.shape_cast %36 : vector<8x8xf32> to vector<1x1x8x8xf32>
    tpu.vector_store %arg10[%c0_22, %c0_23, %c0_24, %c0_25], %39 {strides = array<i32>} : memref<1x1x8x8xf32, #tpu.memory_space<vmem>>, vector<1x1x8x8xf32>,
    %c0_26 = arith.constant 0 : index
    %c0_27 = arith.constant 0 : index
    %40 = vector.load %arg12[%c0_26, %c0_27] : memref<1x8xf32, #tpu.memory_space<vmem>>, vector<1x8xf32>
    %41 = vector.broadcast %21 : vector<1x1xf32> to vector<1x8xf32>
    %42 = arith.mulf %41, %40 : vector<1x8xf32>
    %cst_28 = arith.constant dense<0.000000e+00> : vector<8xf32>
    %43 = vector.multi_reduction <add>, %28, %cst_28 [0] : vector<8x8xf32> to vector<8xf32>
    %44 = vector.shape_cast %43 : vector<8xf32> to vector<1x8xf32>
    %45 = arith.addf %42, %44 : vector<1x8xf32>
    %c0_29 = arith.constant 0 : index
    %c0_30 = arith.constant 0 : index
    %46 = vector.load %arg12[%c0_29, %c0_30] : memref<1x8xf32, #tpu.memory_space<vmem>>, vector<1x8xf32>
    tpu.vector_store %arg12[%c0_29, %c0_30], %45 {strides = array<i32>} : memref<1x8xf32, #tpu.memory_space<vmem>>, vector<1x8xf32>,
    %c0_31 = arith.constant 0 : index
    %c0_32 = arith.constant 0 : index
    %47 = vector.load %arg11[%c0_31, %c0_32] : memref<1x1xf32, #tpu.memory_space<vmem>>, vector<1x1xf32>
    tpu.vector_store %arg11[%c0_31, %c0_32], %19 {strides = array<i32>} : memref<1x1xf32, #tpu.memory_space<vmem>>, vector<1x1xf32>,
    %c0_i32_33 = arith.constant 0 : i32
    %48 = arith.cmpi eq, %arg2, %c0_i32_33 : i32
    %49 = arith.extui %48 : i1 to i32
    %c0_i32_34 = arith.constant 0 : i32
    %50 = arith.cmpi ne, %49, %c0_i32_34 : i32
    scf.if %50 {
      %c0_35 = arith.constant 0 : index
      %c7 = arith.constant 7 : index
      %c0_36 = arith.constant 0 : index
      %51 = vector.load %arg3[%c0_35, %c7, %c0_36] : memref<1x8x4xbf16, #tpu.memory_space<vmem>>, vector<1x1x4xbf16>
      %52 = vector.shape_cast %51 : vector<1x1x4xbf16> to vector<1x4xbf16>
      %c0_37 = arith.constant 0 : index
      %c0_38 = arith.constant 0 : index
      %c0_39 = arith.constant 0 : index
      %53 = vector.load %arg7[%c0_37, %c0_38, %c0_39] : memref<1x4x16xbf16, #tpu.memory_space<vmem>>, vector<1x4x16xbf16>
      %54 = vector.shape_cast %53 : vector<1x4x16xbf16> to vector<4x16xbf16>
      %cst_40 = arith.constant dense<0.000000e+00> : vector<1x16xf32>
      %55 = tpu.matmul %52, %54, %cst_40 {dimension_numbers = #tpu.dot_dimension_numbers<[1], [0], [0], [1], [0, 0, 1, 1], [], []>} : vector<1x4xbf16>, vector<4x16xbf16>, vector<1x16xf32> -> vector<1x16xf32>
      %c0_41 = arith.constant 0 : index
      %c0_42 = arith.constant 0 : index
      %c0_43 = arith.constant 0 : index
      %56 = vector.load %arg8[%c0_41, %c0_42, %c0_43] : memref<1x1x16xf32, #tpu.memory_space<vmem>>, vector<1x1x16xf32>
      %57 = vector.shape_cast %56 : vector<1x1x16xf32> to vector<1x16xf32>
      %58 = arith.addf %55, %57 : vector<1x16xf32>
      %59 = vector.extract_strided_slice %58 {offsets = [0, 0], sizes = [1, 8], strides = [1, 1]} : vector<1x16xf32> to vector<1x8xf32>
      %60 = vector.extract_strided_slice %58 {offsets = [0, 8], sizes = [1, 8], strides = [1, 1]} : vector<1x16xf32> to vector<1x8xf32>
      %61 = arith.negf %60 : vector<1x8xf32>
      %62 = math.exp %61 : vector<1x8xf32>
      %cst_44 = arith.constant 1.000000e+00 : f32
      %63 = vector.broadcast %cst_44 : f32 to vector<1x8xf32>
      %64 = arith.addf %63, %62 : vector<1x8xf32>
      %65 = arith.divf %63, %64 : vector<1x8xf32>
      %c0_45 = arith.constant 0 : index
      %c0_46 = arith.constant 0 : index
      %c0_47 = arith.constant 0 : index
      %c0_48 = arith.constant 0 : index
      %66 = vector.load %arg10[%c0_45, %c0_46, %c0_47, %c0_48] : memref<1x1x8x8xf32, #tpu.memory_space<vmem>>, vector<1x1x8x8xf32>
      %67 = vector.shape_cast %66 : vector<1x1x8x8xf32> to vector<8x8xf32>
      %cst_49 = arith.constant dense<0.000000e+00> : vector<1x8xf32>
      %68 = tpu.matmul %59, %67, %cst_49 {dimension_numbers = #tpu.dot_dimension_numbers<[1], [0], [0], [1], [0, 0, 1, 1], [], []>} : vector<1x8xf32>, vector<8x8xf32>, vector<1x8xf32> -> vector<1x8xf32>
      %c0_50 = arith.constant 0 : index
      %c0_51 = arith.constant 0 : index
      %69 = vector.load %arg12[%c0_50, %c0_51] : memref<1x8xf32, #tpu.memory_space<vmem>>, vector<1x8xf32>
      %70 = arith.mulf %69, %59 : vector<1x8xf32>
      %cst_52 = arith.constant dense<0.000000e+00> : vector<1xf32>
      %71 = vector.multi_reduction <add>, %70, %cst_52 [1] : vector<1x8xf32> to vector<1xf32>
      %72 = vector.shape_cast %71 : vector<1xf32> to vector<1x1xf32>
      %cst_53 = arith.constant 1.000000e+00 : f32
      %73 = vector.broadcast %cst_53 : f32 to vector<1x1xf32>
      %74 = arith.maximumf %72, %73 : vector<1x1xf32>
      %75 = arith.mulf %65, %68 : vector<1x8xf32>
      %76 = vector.broadcast %74 : vector<1x1xf32> to vector<1x8xf32>
      %77 = arith.divf %75, %76 : vector<1x8xf32>
      %c0_54 = arith.constant 0 : index
      %c0_55 = arith.constant 0 : index
      %c0_56 = arith.constant 0 : index
      %c0_57 = arith.constant 0 : index
      %78 = vector.load %arg9[%c0_54, %c0_55, %c0_56, %c0_57] : memref<1x1x1x8xf32, #tpu.memory_space<vmem>>, vector<1x1x1x8xf32>
      %79 = vector.shape_cast %78 : vector<1x1x1x8xf32> to vector<1x8xf32>
      %80 = vector.shape_cast %77 : vector<1x8xf32> to vector<1x1x1x8xf32>
      tpu.vector_store %arg9[%c0_54, %c0_55, %c0_56, %c0_57], %80 {strides = array<i32>} : memref<1x1x1x8xf32, #tpu.memory_space<vmem>>, vector<1x1x1x8xf32>,
    } else {
    }
    return
  }
  func.func @transform_0(%arg0: i32, %arg1: i32, %arg2: i32) -> (i32, i32, i32) {
    %c0_i32 = arith.constant 0 : i32
    %c0_i32_0 = arith.constant 0 : i32
    return %arg0, %arg2, %c0_i32 : i32, i32, i32
  }
  func.func @transform_1(%arg0: i32, %arg1: i32, %arg2: i32) -> (i32, i32, i32, i32) {
    %c0_i32 = arith.constant 0 : i32
    %c0_i32_0 = arith.constant 0 : i32
    return %arg0, %arg1, %arg2, %c0_i32 : i32, i32, i32, i32
  }
  func.func @transform_2(%arg0: i32, %arg1: i32, %arg2: i32) -> (i32, i32, i32) {
    %c0_i32 = arith.constant 0 : i32
    %c0_i32_0 = arith.constant 0 : i32
    %c0_i32_1 = arith.constant 0 : i32
    return %arg1, %c0_i32, %c0_i32_0 : i32, i32, i32
  }
  func.func @transform_3(%arg0: i32, %arg1: i32, %arg2: i32) -> (i32, i32, i32) {
    %c0_i32 = arith.constant 0 : i32
    %c0_i32_0 = arith.constant 0 : i32
    %c0_i32_1 = arith.constant 0 : i32
    return %arg1, %c0_i32, %c0_i32_0 : i32, i32, i32
  }
  func.func @transform_4(%arg0: i32, %arg1: i32, %arg2: i32) -> (i32, i32, i32) {
    %c0_i32 = arith.constant 0 : i32
    %c0_i32_0 = arith.constant 0 : i32
    %c0_i32_1 = arith.constant 0 : i32
    return %arg1, %c0_i32, %c0_i32_0 : i32, i32, i32
  }
  func.func @transform_5(%arg0: i32, %arg1: i32, %arg2: i32) -> (i32, i32, i32) {
    %c0_i32 = arith.constant 0 : i32
    %c0_i32_0 = arith.constant 0 : i32
    %c0_i32_1 = arith.constant 0 : i32
    return %arg1, %c0_i32, %c0_i32_0 : i32, i32, i32
  }
  func.func @transform_6(%arg0: i32, %arg1: i32, %arg2: i32) -> (i32, i32, i32, i32) {
    %c0_i32 = arith.constant 0 : i32
    %c0_i32_0 = arith.constant 0 : i32
    %c0_i32_1 = arith.constant 0 : i32
    return %arg0, %arg1, %c0_i32, %c0_i32_0 : i32, i32, i32, i32
  }
  func.func @transform_7(%arg0: i32, %arg1: i32, %arg2: i32) -> (i32, i32, i32, i32) {
    %c0_i32 = arith.constant 0 : i32
    %c0_i32_0 = arith.constant 0 : i32
    %c0_i32_1 = arith.constant 0 : i32
    return %arg0, %arg1, %c0_i32, %c0_i32_0 : i32, i32, i32, i32
  }
}

</mosaic_0001>

<llo_original>
// kernel: xlstm_pallas.1
$region0: #{xlstm_pallas.1}
  #allocation0 [shape = 'u32[]', space=smem, size = 0x4, offset = 0x4, fixed_abs, tag = 'smem constant byte address 0x4 - core index']
  #allocation1 [shape = 'u32[144,128]{1,0:T(1,128)}', space=vmem, size = 0x12000, scoped, tag = 'internal scratch']
  #allocation2 [shape = 'f32[1,1]{1,0:T(1,128)}', space=vmem, size = 0x200, scoped, tag = 'scratch operand']
  #allocation3 [shape = 'f32[1,8]{1,0:T(1,128)}', space=vmem, size = 0x200, scoped, tag = 'scratch operand']
  %s0 = inlined_call_operand.vmem [shape: bf16[2,8,4], index: 0, kind: input, shape index: {}]
  %s1 = inlined_call_operand.vmem [shape: f32[2,4,8,1], index: 1, kind: input, shape index: {}]
  %s2 = inlined_call_operand.vmem [shape: bf16[4,4,16], index: 2, kind: input, shape index: {}]
  %s3 = inlined_call_operand.vmem [shape: f32[4,1,16], index: 3, kind: input, shape index: {}]
  %s4 = inlined_call_operand.vmem [shape: bf16[4,4,16], index: 4, kind: input, shape index: {}]
  %s5 = inlined_call_operand.vmem [shape: f32[4,1,16], index: 5, kind: input, shape index: {}]
  %s6 = inlined_call_operand.hbm [shape: f32[2,4,1,8], index: 6, kind: output, shape index: {0}]
  %s7 = inlined_call_operand.hbm [shape: f32[2,4,8,8], index: 7, kind: output, shape index: {1}]
  %8 = xla_tuple %s6, %s7
  %s9 = sld [smem:[#allocation0]]
  $region73: #{xlstm_pallas.1} parent=0
    _
  %s11 = ssub.s32 1, %s9
  %s12 = scalar_select 0, %s11, %s9
  $region1: #{xlstm_pallas.1} parent=0
    #allocation4 [shape = 'u8[1024]{0}', space=vmem, size = 0x400, scoped, tag = 'output window, operand 0']
    #allocation5 [shape = 's32[2]{0}', space=sflag, size = 0x8, scoped, tag = 'scoped memory for xlstm_pallas.1']
    #allocation6 [shape = 'u8[8192]{0}', space=vmem, size = 0x2000, scoped, tag = 'output window, operand 1']
    #allocation7 [shape = 's32[2]{0}', space=sflag, size = 0x8, scoped, tag = 'scoped memory for xlstm_pallas.1']
    %13 = vsyncpa [#allocation5], 0
    %s14 = scalar_lea.sflag [#allocation5], 1
    %15 = vsyncpa %s14, 0
    %16 = vsyncpa [#allocation7], 0
    %s17 = scalar_lea.sflag [#allocation7], 1
    %18 = vsyncpa %s17, 0
    loop: start=0, step=1, limit=10
    $region2: #{xlstm_pallas.1} parent=1 // loop_pre_header
      _
    $region3: #{xlstm_pallas.1} parent=1 // loop_header
      %s20 = sphi 0, %s24
      %p21 = scmp.ge.s32.totalorder %s20, 10
      %s27 = sphi 0, %s46
      %s28 = sphi 0, %s42
      %s29 = sphi 0, %s38
      %s30 = sphi 0, %s27
      %s31 = sphi 0, %s28
      %s32 = sphi 0, %s29
      %s33 = sphi 0, %s30
      %s34 = sphi 0, %s31
      %s35 = sphi 0, %s32
      %s51 = sphi 0, %s53
      %s54 = sphi 0, %s51
      %s55 = sphi 0, %s54
      %s71 = sphi 0, %s55
      %s81 = sphi 0, %s83
      %s84 = sphi 0, %s81
      %s85 = sphi 0, %s84
      %s101 = sphi 0, %s85
      %s107 = sphi 0, %s109
      %s110 = sphi 0, %s107
      %s111 = sphi 0, %s110
      %s127 = sphi 0, %s111
      %s133 = sphi 0, %s135
      %s136 = sphi 0, %s133
      %s137 = sphi 0, %s136
      %s153 = sphi 0, %s137
      %s159 = sphi 0, %s161
      %s162 = sphi 0, %s159
      %s163 = sphi 0, %s162
      %s179 = sphi 0, %s163
      %s185 = sphi 0, %s187
      %s188 = sphi 0, %s185
      %s189 = sphi 0, %s188
      %s205 = sphi 0, %s189
      %s213 = sphi 0, %s215
      %s216 = sphi 0, %s213
      %s217 = sphi 0, %s216
      %s233 = sphi 0, %s217
      %s241 = sphi 0, %s243
      %s244 = sphi 0, %s241
      %s245 = sphi 0, %s244
      %s261 = sphi 0, %s245
    $region4: #{xlstm_pallas.1} parent=1 // loop_header_branch
      %23 = sbr.rel (%p21) target = $region8
    $region5: #{xlstm_pallas.1} parent=1 // loop_body
      %s25 = ssub.s32 %s20, 1
      %s26 = ssub.s32 %s20, 2
      %s36 = sadd.s32 1, %s29
      %p37 = scmp.ge.s32.totalorder %s36, 1
      %s38 = scalar_select %p37, 0, %s36
      %s39 = sadd.s32 1, %s28
      %s40 = scalar_select %p37, %s39, %s28
      %p41 = scmp.ge.s32.totalorder %s40, 4
      %s42 = scalar_select %p41, 0, %s40
      %s43 = sadd.s32 1, %s27
      %s44 = scalar_select %p41, %s43, %s27
      %p45 = scmp.ge.s32.totalorder %s44, 2
      %s46 = scalar_select %p45, 0, %s44
      %s47 = ssub.s32 %s27, %s46
      %s48 = ssub.s32 %s29, %s38
      %s49 = sor.u32 %s47, %s48
      %p50 = scmp.eq.s32.totalorder %s49, 0
      %s52 = sadd.s32 %s51, 1
      %s53 = scalar_select %p50, %s51, %s52
      %p56 = pneg %p50
      %p57 = scmp.eq.s32.totalorder %s20, 7
      %p58 = por %p56, %p57
      %p59 = scmp.ne.s32.totalorder %s51, %s54
      %p60 = scmp.eq.s32.totalorder %s20, 0
      %p61 = por %p59, %p60
      %p62 = scmp.ne.s32.totalorder %s51, %s54
      %p63 = scmp.eq.s32.totalorder %s25, 7
      %p64 = por %p62, %p63
      %p65 = scmp.ne.s32.totalorder %s54, %s55
      %p66 = scmp.eq.s32.totalorder %s25, 0
      %p67 = por %p65, %p66
      %p68 = scmp.ne.s32.totalorder %s54, %s55
      %p69 = scmp.eq.s32.totalorder %s26, 7
      %p70 = por %p68, %p69
      %p72 = scmp.ne.s32.totalorder %s55, %s71
      %p73 = scmp.eq.s32.totalorder %s26, 0
      %p74 = por %p72, %p73
      %s75 = ssub.s32 %s27, %s46
      %s76 = ssub.s32 %s28, %s42
      %s77 = sor.u32 %s75, %s76
      %s78 = ssub.s32 %s29, %s38
      %s79 = sor.u32 %s77, %s78
      %p80 = scmp.eq.s32.totalorder %s79, 0
      %s82 = sadd.s32 %s81, 1
      %s83 = scalar_select %p80, %s81, %s82
      %p86 = pneg %p80
      %p87 = scmp.eq.s32.totalorder %s20, 7
      %p88 = por %p86, %p87
      %p89 = scmp.ne.s32.totalorder %s81, %s84
      %p90 = scmp.eq.s32.totalorder %s20, 0
      %p91 = por %p89, %p90
      %p92 = scmp.ne.s32.totalorder %s81, %s84
      %p93 = scmp.eq.s32.totalorder %s25, 7
      %p94 = por %p92, %p93
      %p95 = scmp.ne.s32.totalorder %s84, %s85
      %p96 = scmp.eq.s32.totalorder %s25, 0
      %p97 = por %p95, %p96
      %p98 = scmp.ne.s32.totalorder %s84, %s85
      %p99 = scmp.eq.s32.totalorder %s26, 7
      %p100 = por %p98, %p99
      %p102 = scmp.ne.s32.totalorder %s85, %s101
      %p103 = scmp.eq.s32.totalorder %s26, 0
      %p104 = por %p102, %p103
      %s105 = ssub.s32 %s28, %s42
      %p106 = scmp.eq.s32.totalorder %s105, 0
      %s108 = sadd.s32 %s107, 1
      %s109 = scalar_select %p106, %s107, %s108
      %p112 = pneg %p106
      %p113 = scmp.eq.s32.totalorder %s20, 7
      %p114 = por %p112, %p113
      %p115 = scmp.ne.s32.totalorder %s107, %s110
      %p116 = scmp.eq.s32.totalorder %s20, 0
      %p117 = por %p115, %p116
      %p118 = scmp.ne.s32.totalorder %s107, %s110
      %p119 = scmp.eq.s32.totalorder %s25, 7
      %p120 = por %p118, %p119
      %p121 = scmp.ne.s32.totalorder %s110, %s111
      %p122 = scmp.eq.s32.totalorder %s25, 0
      %p123 = por %p121, %p122
      %p124 = scmp.ne.s32.totalorder %s110, %s111
      %p125 = scmp.eq.s32.totalorder %s26, 7
      %p126 = por %p124, %p125
      %p128 = scmp.ne.s32.totalorder %s111, %s127
      %p129 = scmp.eq.s32.totalorder %s26, 0
      %p130 = por %p128, %p129
      %s131 = ssub.s32 %s28, %s42
      %p132 = scmp.eq.s32.totalorder %s131, 0
      %s134 = sadd.s32 %s133, 1
      %s135 = scalar_select %p132, %s133, %s134
      %p138 = pneg %p132
      %p139 = scmp.eq.s32.totalorder %s20, 7
      %p140 = por %p138, %p139
      %p141 = scmp.ne.s32.totalorder %s133, %s136
      %p142 = scmp.eq.s32.totalorder %s20, 0
      %p143 = por %p141, %p142
      %p144 = scmp.ne.s32.totalorder %s133, %s136
      %p145 = scmp.eq.s32.totalorder %s25, 7
      %p146 = por %p144, %p145
      %p147 = scmp.ne.s32.totalorder %s136, %s137
      %p148 = scmp.eq.s32.totalorder %s25, 0
      %p149 = por %p147, %p148
      %p150 = scmp.ne.s32.totalorder %s136, %s137
      %p151 = scmp.eq.s32.totalorder %s26, 7
      %p152 = por %p150, %p151
      %p154 = scmp.ne.s32.totalorder %s137, %s153
      %p155 = scmp.eq.s32.totalorder %s26, 0
      %p156 = por %p154, %p155
      %s157 = ssub.s32 %s28, %s42
      %p158 = scmp.eq.s32.totalorder %s157, 0
      %s160 = sadd.s32 %s159, 1
      %s161 = scalar_select %p158, %s159, %s160
      %p164 = pneg %p158
      %p165 = scmp.eq.s32.totalorder %s20, 7
      %p166 = por %p164, %p165
      %p167 = scmp.ne.s32.totalorder %s159, %s162
      %p168 = scmp.eq.s32.totalorder %s20, 0
      %p169 = por %p167, %p168
      %p170 = scmp.ne.s32.totalorder %s159, %s162
      %p171 = scmp.eq.s32.totalorder %s25, 7
      %p172 = por %p170, %p171
      %p173 = scmp.ne.s32.totalorder %s162, %s163
      %p174 = scmp.eq.s32.totalorder %s25, 0
      %p175 = por %p173, %p174
      %p176 = scmp.ne.s32.totalorder %s162, %s163
      %p177 = scmp.eq.s32.totalorder %s26, 7
      %p178 = por %p176, %p177
      %p180 = scmp.ne.s32.totalorder %s163, %s179
      %p181 = scmp.eq.s32.totalorder %s26, 0
      %p182 = por %p180, %p181
      %s183 = ssub.s32 %s28, %s42
      %p184 = scmp.eq.s32.totalorder %s183, 0
      %s186 = sadd.s32 %s185, 1
      %s187 = scalar_select %p184, %s185, %s186
      %p190 = pneg %p184
      %p191 = scmp.eq.s32.totalorder %s20, 7
      %p192 = por %p190, %p191
      %p193 = scmp.ne.s32.totalorder %s185, %s188
      %p194 = scmp.eq.s32.totalorder %s20, 0
      %p195 = por %p193, %p194
      %p196 = scmp.ne.s32.totalorder %s185, %s188
      %p197 = scmp.eq.s32.totalorder %s25, 7
      %p198 = por %p196, %p197
      %p199 = scmp.ne.s32.totalorder %s188, %s189
      %p200 = scmp.eq.s32.totalorder %s25, 0
      %p201 = por %p199, %p200
      %p202 = scmp.ne.s32.totalorder %s188, %s189
      %p203 = scmp.eq.s32.totalorder %s26, 7
      %p204 = por %p202, %p203
      %p206 = scmp.ne.s32.totalorder %s189, %s205
      %p207 = scmp.eq.s32.totalorder %s26, 0
      %p208 = por %p206, %p207
      %s209 = ssub.s32 %s27, %s46
      %s210 = ssub.s32 %s28, %s42
      %s211 = sor.u32 %s209, %s210
      %p212 = scmp.eq.s32.totalorder %s211, 0
      %s214 = sadd.s32 %s213, 1
      %s215 = scalar_select %p212, %s213, %s214
      %p218 = pneg %p212
      %p219 = scmp.eq.s32.totalorder %s20, 7
      %p220 = por %p218, %p219
      %p221 = scmp.ne.s32.totalorder %s213, %s216
      %p222 = scmp.eq.s32.totalorder %s20, 0
      %p223 = por %p221, %p222
      %p224 = scmp.ne.s32.totalorder %s213, %s216
      %p225 = scmp.eq.s32.totalorder %s25, 7
      %p226 = por %p224, %p225
      %p227 = scmp.ne.s32.totalorder %s216, %s217
      %p228 = scmp.eq.s32.totalorder %s25, 0
      %p229 = por %p227, %p228
      %p230 = scmp.ne.s32.totalorder %s216, %s217
      %p231 = scmp.eq.s32.totalorder %s26, 7
      %p232 = por %p230, %p231
      %p234 = scmp.ne.s32.totalorder %s217, %s233
      %p235 = scmp.eq.s32.totalorder %s26, 0
      %p236 = por %p234, %p235
      %s237 = ssub.s32 %s27, %s46
      %s238 = ssub.s32 %s28, %s42
      %s239 = sor.u32 %s237, %s238
      %p240 = scmp.eq.s32.totalorder %s239, 0
      %s242 = sadd.s32 %s241, 1
      %s243 = scalar_select %p240, %s241, %s242
      %p246 = pneg %p240
      %p247 = scmp.eq.s32.totalorder %s20, 7
      %p248 = por %p246, %p247
      %p249 = scmp.ne.s32.totalorder %s241, %s244
      %p250 = scmp.eq.s32.totalorder %s20, 0
      %p251 = por %p249, %p250
      %p252 = scmp.ne.s32.totalorder %s241, %s244
      %p253 = scmp.eq.s32.totalorder %s25, 7
      %p254 = por %p252, %p253
      %p255 = scmp.ne.s32.totalorder %s244, %s245
      %p256 = scmp.eq.s32.totalorder %s25, 0
      %p257 = por %p255, %p256
      %p258 = scmp.ne.s32.totalorder %s244, %s245
      %p259 = scmp.eq.s32.totalorder %s26, 7
      %p260 = por %p258, %p259
      %p262 = scmp.ne.s32.totalorder %s245, %s261
      %p263 = scmp.eq.s32.totalorder %s26, 0
      %p264 = por %p262, %p263
      %p265 = scmp.le.s32.totalorder 1, %s20
      %p266 = scmp.lt.s32.totalorder %s20, 9
      %p267 = pnand %p265, %p266
      %p268 = pneg %p267
      // Predicated region
      $region9: #{xlstm_pallas.1} parent=5 // pred_check
        _
      $region10: #{xlstm_pallas.1} parent=5 // pred_check_branch
        %270 = sbr.rel (%p267) target = $region12
      $region11: #{xlstm_pallas.1} parent=5 // pred_region
        %s271 = ssub.s32 %s20, 1
      $region12: #{xlstm_pallas.1} parent=5 // pred_fallthru
        _
      %p272 = scmp.lt.s32.totalorder %s20, 8
      // Predicated region
      $region13: #{xlstm_pallas.1} parent=5 // pred_check
        %p273 = pneg %p272
      $region14: #{xlstm_pallas.1} parent=5 // pred_check_branch
        %275 = sbr.rel (%p273) target = $region16
      $region15: #{xlstm_pallas.1} parent=5 // pred_region
        // Predicated region
        $region17: #{xlstm_pallas.1} parent=15 // pred_check
          %p276 = pneg %p61
        $region18: #{xlstm_pallas.1} parent=15 // pred_check_branch
          %278 = sbr.rel (%p276) target = $region20
        $region19: #{xlstm_pallas.1} parent=15 // pred_region
          %p279 = scmp.lt.s32.totalorder %s27, 1
          %s280 = scalar_select %p279, %s27, 1
          %p281 = scmp.lt.s32.totalorder %s29, 0
          %s282 = scalar_select %p281, %s29, 0
          %s283 = sadd.s32 %s282, %s280
          %s284 = smul.addr %s283, 4
          %s285 = scalar_lea.vmem %s0, %s284
        $region20: #{xlstm_pallas.1} parent=15 // pred_fallthru
          _
        // Predicated region
        $region21: #{xlstm_pallas.1} parent=15 // pred_check
          %p286 = pneg %p91
        $region22: #{xlstm_pallas.1} parent=15 // pred_check_branch
          %288 = sbr.rel (%p286) target = $region24
        $region23: #{xlstm_pallas.1} parent=15 // pred_region
          %p289 = scmp.lt.s32.totalorder %s27, 1
          %s290 = scalar_select %p289, %s27, 1
          %p291 = scmp.lt.s32.totalorder %s28, 3
          %s292 = scalar_select %p291, %s28, 3
          %p293 = scmp.lt.s32.totalorder %s29, 0
          %s294 = scalar_select %p293, %s29, 0
          %s295 = sadd.s32 %s294, %s292
          %s296 = smul.addr %s290, 4
          %s297 = sadd.s32 %s295, %s296
          %s298 = smul.addr %s297, 8
          %s299 = scalar_lea.vmem %s1, %s298
        $region24: #{xlstm_pallas.1} parent=15 // pred_fallthru
          _
        // Predicated region
        $region25: #{xlstm_pallas.1} parent=15 // pred_check
          %p300 = pneg %p117
        $region26: #{xlstm_pallas.1} parent=15 // pred_check_branch
          %302 = sbr.rel (%p300) target = $region28
        $region27: #{xlstm_pallas.1} parent=15 // pred_region
          %p303 = scmp.lt.s32.totalorder %s28, 3
          %s304 = scalar_select %p303, %s28, 3
          %s305 = smul.addr %s304, 2
          %s306 = scalar_lea.vmem %s2, %s305
        $region28: #{xlstm_pallas.1} parent=15 // pred_fallthru
          _
        // Predicated region
        $region29: #{xlstm_pallas.1} parent=15 // pred_check
          %p307 = pneg %p143
        $region30: #{xlstm_pallas.1} parent=15 // pred_check_branch
          %309 = sbr.rel (%p307) target = $region32
        $region31: #{xlstm_pallas.1} parent=15 // pred_region
          %p310 = scmp.lt.s32.totalorder %s28, 3
          %s311 = scalar_select %p310, %s28, 3
          %s312 = scalar_lea.vmem %s3, %s311
        $region32: #{xlstm_pallas.1} parent=15 // pred_fallthru
          _
        // Predicated region
        $region33: #{xlstm_pallas.1} parent=15 // pred_check
          %p313 = pneg %p169
        $region34: #{xlstm_pallas.1} parent=15 // pred_check_branch
          %315 = sbr.rel (%p313) target = $region36
        $region35: #{xlstm_pallas.1} parent=15 // pred_region
          %p316 = scmp.lt.s32.totalorder %s28, 3
          %s317 = scalar_select %p316, %s28, 3
          %s318 = smul.addr %s317, 2
          %s319 = scalar_lea.vmem %s4, %s318
        $region36: #{xlstm_pallas.1} parent=15 // pred_fallthru
          _
        // Predicated region
        $region37: #{xlstm_pallas.1} parent=15 // pred_check
          %p320 = pneg %p195
        $region38: #{xlstm_pallas.1} parent=15 // pred_check_branch
          %322 = sbr.rel (%p320) target = $region40
        $region39: #{xlstm_pallas.1} parent=15 // pred_region
          %p323 = scmp.lt.s32.totalorder %s28, 3
          %s324 = scalar_select %p323, %s28, 3
          %s325 = scalar_lea.vmem %s5, %s324
        $region40: #{xlstm_pallas.1} parent=15 // pred_fallthru
          _
      $region16: #{xlstm_pallas.1} parent=5 // pred_fallthru
        _
      %p326 = scmp.le.s32.totalorder 1, %s20
      %p327 = scmp.lt.s32.totalorder %s20, 9
      %p328 = pnand %p326, %p327
      %p329 = pneg %p328
      // Predicated region
      $region41: #{xlstm_pallas.1} parent=5 // pred_check
        _
      $region42: #{xlstm_pallas.1} parent=5 // pred_check_branch
        %331 = sbr.rel (%p328) target = $region44
      $region43: #{xlstm_pallas.1} parent=5 // pred_region
        %s332 = ssub.s32 %s20, 1
        %p333 = scmp.lt.s32.totalorder %s30, 1
        %s334 = scalar_select %p333, %s30, 1
        %p335 = scmp.lt.s32.totalorder %s32, 0
        %s336 = scalar_select %p335, %s32, 0
        %s337 = sadd.s32 %s336, %s334
        %s338 = smul.addr %s337, 4
        %s339 = scalar_lea.vmem %s0, %s338
        %p340 = pneg %p67
        %p341 = pneg %p64
        %p342 = scmp.lt.s32.totalorder %s30, 1
        %s343 = scalar_select %p342, %s30, 1
        %p344 = scmp.lt.s32.totalorder %s31, 3
        %s345 = scalar_select %p344, %s31, 3
        %p346 = scmp.lt.s32.totalorder %s32, 0
        %s347 = scalar_select %p346, %s32, 0
        %s348 = sadd.s32 %s347, %s345
        %s349 = smul.addr %s343, 4
        %s350 = sadd.s32 %s348, %s349
        %s351 = smul.addr %s350, 8
        %s352 = scalar_lea.vmem %s1, %s351
        %p353 = pneg %p97
        %p354 = pneg %p94
        %p355 = scmp.lt.s32.totalorder %s31, 3
        %s356 = scalar_select %p355, %s31, 3
        %s357 = smul.addr %s356, 2
        %s358 = scalar_lea.vmem %s2, %s357
        %p359 = pneg %p123
        %p360 = pneg %p120
        %p361 = scmp.lt.s32.totalorder %s31, 3
        %s362 = scalar_select %p361, %s31, 3
        %s363 = scalar_lea.vmem %s3, %s362
        %p364 = pneg %p149
        %p365 = pneg %p146
        %p366 = scmp.lt.s32.totalorder %s31, 3
        %s367 = scalar_select %p366, %s31, 3
        %s368 = smul.addr %s367, 2
        %s369 = scalar_lea.vmem %s4, %s368
        %p370 = pneg %p175
        %p371 = pneg %p172
        %p372 = scmp.lt.s32.totalorder %s31, 3
        %s373 = scalar_select %p372, %s31, 3
        %s374 = scalar_lea.vmem %s5, %s373
        %p375 = pneg %p201
        %p376 = pneg %p198
        %p377 = pneg %p229
        %p378 = pneg %p226
        %s379 = sand.u32 %s216, 1
        %s380 = scalar_lea.sflag [#allocation5], %s379
        %s381 = sand.u32 %s216, 1
        %s382 = scalar_lea.vmem [#allocation4], %s381
        %p383 = pneg %p257
        %p384 = pneg %p254
        %s385 = sand.u32 %s244, 1
        %s386 = scalar_lea.sflag [#allocation7], %s385
        %s387 = sand.u32 %s244, 1
        %s388 = smul.addr %s387, 8
        %s389 = scalar_lea.vmem [#allocation6], %s388
        %p390 = scmp.lt.s32.totalorder %s30, 1
        %s391 = scalar_select %p390, %s30, 1
        %p392 = scmp.lt.s32.totalorder %s32, 0
        %s393 = scalar_select %p392, %s32, 0
        %s394 = sadd.s32 %s393, %s391
        %s395 = smul.addr %s394, 4
        %s396 = scalar_lea.vmem %s0, %s395
        %p397 = scmp.lt.s32.totalorder %s30, 1
        %s398 = scalar_select %p397, %s30, 1
        %p399 = scmp.lt.s32.totalorder %s31, 3
        %s400 = scalar_select %p399, %s31, 3
        %p401 = scmp.lt.s32.totalorder %s32, 0
        %s402 = scalar_select %p401, %s32, 0
        %s403 = sadd.s32 %s402, %s400
        %s404 = smul.addr %s398, 4
        %s405 = sadd.s32 %s403, %s404
        %s406 = smul.addr %s405, 8
        %s407 = scalar_lea.vmem %s1, %s406
        %p408 = scmp.lt.s32.totalorder %s31, 3
        %s409 = scalar_select %p408, %s31, 3
        %s410 = smul.addr %s409, 2
        %s411 = scalar_lea.vmem %s2, %s410
        %p412 = scmp.lt.s32.totalorder %s31, 3
        %s413 = scalar_select %p412, %s31, 3
        %s414 = scalar_lea.vmem %s3, %s413
        %p415 = scmp.lt.s32.totalorder %s31, 3
        %s416 = scalar_select %p415, %s31, 3
        %s417 = smul.addr %s416, 2
        %s418 = scalar_lea.vmem %s4, %s417
        %p419 = scmp.lt.s32.totalorder %s31, 3
        %s420 = scalar_select %p419, %s31, 3
        %s421 = scalar_lea.vmem %s5, %s420
        %p423 = scmp.eq.s32.totalorder %s32, 0
        // Predicated region
        $region45: #{xlstm_pallas.1} parent=43 // pred_check
          %p424 = pneg %p423
        $region46: #{xlstm_pallas.1} parent=43 // pred_check_branch
          %426 = sbr.rel (%p424) target = $region48
        $region47: #{xlstm_pallas.1} parent=43 // pred_region
          %vm427 = vcmask 0
          %428 = vst.msk [vmem:[#allocation2] sm:$0x1] %vm427, 0.0
          %vm429 = vcmask 57344
          %430 = vst.msk [vmem:[#allocation3] sm:$0x1] %vm429, 0.0
          %vm431 = vcmask 64512
          %432 = vst.msk [vmem:[%s389] sm:$0xff] %vm431, 0.0
        $region48: #{xlstm_pallas.1} parent=43 // pred_fallthru
          _
        %v433 = vld [vmem:[%s396] sm:$0xf]
        %v434 = vld [vmem:[%s411] sm:$0x3]
        %v435 = vld [vmem:[%s414] sm:$0x1]
        %v437 = vlaneseq
        %v438 = vshrl.u32 %v437, 7
        %v439 = vsub.s32 0, %v438
        %v440 = vrot.slane %v435, %v439
        %vm442 = vcmask 31744
        %v444 = vsel %vm442, %v433, 0
        %vm446 = vcmask 1041408
        %v448 = vsel %vm446, %v434, 0
        %450 = vmatprep.subr.bf16.mxu0 0
        %451 = vmatpush1.bf16.msra.mxu0 0
        %452 = vmatprep.subr.bf16.mxu0 0
        %453 = vmatpush1.bf16.msra.mxu0 0
        %454 = vmatprep.subr.bf16.mxu0 0
        %455 = vmatpush1.bf16.msra.mxu0 0
        %456 = vmatprep.subr.bf16.mxu0 0
        %457 = vmatpush1.bf16.msra.mxu0 0
        %458 = vmatprep.subr.bf16.mxu0 0
        %459 = vmatpush1.bf16.msra.mxu0 0
        %460 = vmatprep.subr.bf16.mxu0 0
        %461 = vmatpush1.bf16.msra.mxu0 0
        %462 = vmatprep.subr.bf16.mxu0 0
        %463 = vmatpush1.bf16.msra.mxu0 0
        %464 = vmatprep.subr.bf16.mxu0 0
        %465 = vmatpush1.bf16.msra.mxu0 %v448
        %466 = vmatprep.subr.bf16.mxu0 0
        %467 = vmatpush2.bf16.msra.mxu0 0
        %468 = vmatprep.subr.bf16.mxu0 0
        %469 = vmatpush2.bf16.msra.mxu0 0
        %470 = vmatprep.subr.bf16.mxu0 0
        %471 = vmatpush2.bf16.msra.mxu0 0
        %472 = vmatprep.subr.bf16.mxu0 0
        %473 = vmatpush2.bf16.msra.mxu0 0
        %474 = vmatprep.subr.bf16.mxu0 0
        %475 = vmatpush2.bf16.msra.mxu0 0
        %476 = vmatprep.subr.bf16.mxu0 0
        %477 = vmatpush2.bf16.msra.mxu0 0
        %478 = vmatprep.subr.bf16.mxu0 0
        %479 = vmatpush2.bf16.msra.mxu0 0
        %480 = vmatprep.subr.bf16.mxu0 0
        %481 = vmatpush2.bf16.msra.mxu0 0
        %482 = vmatprep.mubr.bf16.mxu0 0
        %483 = vmatmul.mubr.bf16.gmra.mxu0 %v444
        %v484 = vpop.f32.mrf.mxu0
        %v485 = vadd.f32 %v440, %v484
        %v486 = vpop.f32.mrf.mxu0
        %v487 = vpop.f32.mrf.mxu0
        %v488 = vpop.f32.mrf.mxu0
        %489 = vdwg.mxu0
        %v490 = vld [vmem:[%s407] sm:$0xff]
        %v491 = vld [vmem:[#allocation2] sm:$0x1]
        %vm492 = vcmask 7168
        %v493 = vsel %vm492, %v490, -inf
        %v494 = vrot.slane %v493, 4
        %v495 = vmax.f32 %v493, %v494
        %v496 = vrot.slane %v495, 2
        %v497 = vmax.f32 %v495, %v496
        %v498 = vrot.slane %v497, 1
        %v499 = vmax.f32 %v497, %v498
        %v500 = vmax.f32 %v491, %v499
        %v501 = vsub.f32 %v491, %v500
        %v502 = vmul.f32 %v501, 1.442695
        %v503 = vpow.pop %v502
        %v505 = vlaneseq
        %v506 = vshrl.u32 %v505, 7
        %v507 = vsub.s32 0, %v506
        %v508 = vrot.slane %v500, %v507
        %v510 = vsub.f32 %v490, %v508
        %v511 = vmul.f32 %v510, 1.442695
        %v512 = vpow.pop %v511
        %v513 = vmul.f32 %v512, 0.5
        %515 = vset.pattern.permute.xlu0 0
        %516 = vperm.xlu0 %515, %v513
        %v517 = vpop.permute.xlu0 %516
        %v519 = vmul.f32 %v485, %v517
        %v520 = vpack.c.bf16 %v485, %v485
        %v521 = vpack.c.bf16 %v519, %v519
        %522 = vxpose.xlu0.c.b16.start [1/8] %v520, 128
        %523 = vxpose.xlu0.c.b16.cont [2/8] 0, 128
        %524 = vxpose.xlu0.c.b16.cont [3/8] 0, 128
        %525 = vxpose.xlu0.c.b16.cont [4/8] 0, 128
        %526 = vxpose.xlu0.c.b16.cont [5/8] 0, 128
        %527 = vxpose.xlu0.c.b16.cont [6/8] 0, 128
        %528 = vxpose.xlu0.c.b16.cont [7/8] 0, 128
        %529 = vxpose.xlu0.c.b16.end [8/8] 0, 128
        %v530 = vpop.trf.xlu0
        %v531 = vpop.trf.xlu0
        %v532 = vpop.trf.xlu0
        %v533 = vpop.trf.xlu0
        %v534 = vpop.trf.xlu0
        %v535 = vpop.trf.xlu0
        %v536 = vpop.trf.xlu0
        %v537 = vpop.trf.xlu0
        %539 = vrot.lane.b32.xlu0 %v521, 120
        %v540 = vpop.permute.xlu0 %539
        %vm541 = vcmask 64512
        %v543 = vsel %vm541, %v530, 0
        %vm545 = vcmask 1043456
        %v547 = vsel %vm545, %v540, 0
        %549 = vmatprep.subr.bf16.mxu0 0
        %550 = vmatpush1.bf16.msra.mxu0 0
        %551 = vmatprep.subr.bf16.mxu0 0
        %552 = vmatpush1.bf16.msra.mxu0 0
        %553 = vmatprep.subr.bf16.mxu0 0
        %554 = vmatpush1.bf16.msra.mxu0 0
        %555 = vmatprep.subr.bf16.mxu0 0
        %556 = vmatpush1.bf16.msra.mxu0 0
        %557 = vmatprep.subr.bf16.mxu0 0
        %558 = vmatpush1.bf16.msra.mxu0 0
        %559 = vmatprep.subr.bf16.mxu0 0
        %560 = vmatpush1.bf16.msra.mxu0 0
        %561 = vmatprep.subr.bf16.mxu0 0
        %562 = vmatpush1.bf16.msra.mxu0 0
        %563 = vmatprep.subr.bf16.mxu0 0
        %564 = vmatpush1.bf16.msra.mxu0 %v547
        %565 = vmatprep.subr.bf16.mxu0 0
        %566 = vmatpush2.bf16.msra.mxu0 0
        %567 = vmatprep.subr.bf16.mxu0 0
        %568 = vmatpush2.bf16.msra.mxu0 0
        %569 = vmatprep.subr.bf16.mxu0 0
        %570 = vmatpush2.bf16.msra.mxu0 0
        %571 = vmatprep.subr.bf16.mxu0 0
        %572 = vmatpush2.bf16.msra.mxu0 0
        %573 = vmatprep.subr.bf16.mxu0 0
        %574 = vmatpush2.bf16.msra.mxu0 0
        %575 = vmatprep.subr.bf16.mxu0 0
        %576 = vmatpush2.bf16.msra.mxu0 0
        %577 = vmatprep.subr.bf16.mxu0 0
        %578 = vmatpush2.bf16.msra.mxu0 0
        %579 = vmatprep.subr.bf16.mxu0 0
        %580 = vmatpush2.bf16.msra.mxu0 0
        %581 = vmatprep.mubr.bf16.mxu0 0
        %582 = vmatmul.mubr.bf16.gmra.mxu0 %v543
        %v583 = vpop.f32.mrf.mxu0
        %v584 = vadd.f32 0.0, %v583
        %v585 = vpop.f32.mrf.mxu0
        %v586 = vpop.f32.mrf.mxu0
        %v587 = vpop.f32.mrf.mxu0
        %588 = vdwg.mxu0
        %v589 = vld [vmem:[%s389] sm:$0xff]
        %v591 = vlaneseq
        %v592 = vshrl.u32 %v591, 7
        %v593 = vsub.s32 0, %v592
        %v594 = vrot.slane %v503, %v593
        %595 = vset.pattern.permute.xlu0 0
        %596 = vperm.xlu0 %595, %v594
        %v597 = vpop.permute.xlu0 %596
        %v599 = vmul.f32 %v597, %v589
        %v600 = vadd.f32 %v599, %v584
        %601 = vst.msk [vmem:[%s389] sm:$0xff] %vm541, %v600
        %v602 = vld [vmem:[#allocation3] sm:$0x1]
        %603 = vset.pattern.permute.xlu0 0
        %604 = vperm.xlu0 %603, %v503
        %v605 = vpop.permute.xlu0 %604
        %v607 = vlaneseq
        %v608 = vshrl.u32 %v607, 7
        %v609 = vsub.s32 0, %v608
        %v610 = vrot.slane %v605, %v609
        %v611 = vmul.f32 %v610, %v602
        %vm612 = vcmask 130112
        %v613 = vsel %vm612, %v519, 0.0
        %v614 = vrot.slane %v613, 4
        %v615 = vadd.f32 %v613, %v614
        %v616 = vrot.slane %v615, 2
        %v617 = vadd.f32 %v615, %v616
        %v618 = vrot.slane %v617, 1
        %v619 = vadd.f32 %v617, %v618
        %v622 = vunpack.c.l.s4 1966171168
        %v623 = vunpack.c.0.s8 %v622
        %v624 = vlaneseq
        %v625 = vshrl.u32 %v624, 7
        %v626 = vsub.s32 %v623, %v625
        %v627 = vrot.slane %v619, %v626
        %v629 = vunpack.c.l.s4 1966171168
        %v630 = vunpack.c.0.s8 %v629
        %v631 = vlaneseq
        %v632 = vshrl.u32 %v631, 7
        %v633 = vsub.s32 %v630, %v632
        %v634 = vrot.slane %v627, %v633
        %635 = vrot.lane.b32.xlu0 %v634, 120
        %v636 = vpop.permute.xlu0 %635
        %v638 = vadd.f32 %v611, %v636
        %vm639 = vcmask 57344
        %640 = vst.msk [vmem:[#allocation3] sm:$0x1] %vm639, %v638
        %vm641 = vcmask 0
        %642 = vst.msk [vmem:[#allocation2] sm:$0x1] %vm641, %v500
        // Predicated region
        $region49: #{xlstm_pallas.1} parent=43 // pred_check
          %p643 = pneg %p423
        $region50: #{xlstm_pallas.1} parent=43 // pred_check_branch
          %645 = sbr.rel (%p643) target = $region52
        $region51: #{xlstm_pallas.1} parent=43 // pred_region
          %v646 = vld [vmem:[%s396] sm:$0x8]
          %v647 = vld [vmem:[%s418] sm:$0x3]
          %v648 = vld [vmem:[%s421] sm:$0x1]
          %v650 = vunpack.c.l.b16 %v646
          %v651 = vpack.c.b16 %v650, %v650
          %v653 = vshrl.u32 %v651, 16
          %v655 = vrot.slane %v653, 3
          %v657 = vsel %vm442, %v655, 0
          %v660 = vsel %vm446, %v647, 0
          %662 = vmatprep.subr.bf16.mxu0 0
          %663 = vmatpush1.bf16.msra.mxu0 0
          %664 = vmatprep.subr.bf16.mxu0 0
          %665 = vmatpush1.bf16.msra.mxu0 0
          %666 = vmatprep.subr.bf16.mxu0 0
          %667 = vmatpush1.bf16.msra.mxu0 0
          %668 = vmatprep.subr.bf16.mxu0 0
          %669 = vmatpush1.bf16.msra.mxu0 0
          %670 = vmatprep.subr.bf16.mxu0 0
          %671 = vmatpush1.bf16.msra.mxu0 0
          %672 = vmatprep.subr.bf16.mxu0 0
          %673 = vmatpush1.bf16.msra.mxu0 0
          %674 = vmatprep.subr.bf16.mxu0 0
          %675 = vmatpush1.bf16.msra.mxu0 0
          %676 = vmatprep.subr.bf16.mxu0 0
          %677 = vmatpush1.bf16.msra.mxu0 %v660
          %678 = vmatprep.subr.bf16.mxu0 0
          %679 = vmatpush2.bf16.msra.mxu0 0
          %680 = vmatprep.subr.bf16.mxu0 0
          %681 = vmatpush2.bf16.msra.mxu0 0
          %682 = vmatprep.subr.bf16.mxu0 0
          %683 = vmatpush2.bf16.msra.mxu0 0
          %684 = vmatprep.subr.bf16.mxu0 0
          %685 = vmatpush2.bf16.msra.mxu0 0
          %686 = vmatprep.subr.bf16.mxu0 0
          %687 = vmatpush2.bf16.msra.mxu0 0
          %688 = vmatprep.subr.bf16.mxu0 0
          %689 = vmatpush2.bf16.msra.mxu0 0
          %690 = vmatprep.subr.bf16.mxu0 0
          %691 = vmatpush2.bf16.msra.mxu0 0
          %692 = vmatprep.subr.bf16.mxu0 0
          %693 = vmatpush2.bf16.msra.mxu0 0
          %694 = vmatprep.mubr.bf16.mxu0 0
          %695 = vmatmul.mubr.bf16.gmra.mxu0 %v657
          %v696 = vpop.f32.mrf.mxu0
          %v697 = vadd.f32 %v648, %v696
          %v698 = vpop.f32.mrf.mxu0
          %v699 = vpop.f32.mrf.mxu0
          %v700 = vpop.f32.mrf.mxu0
          %701 = vdwg.mxu0
          %v702 = vxor.u32 %v697, 2147483648
          %v703 = vmul.f32 %v702, 1.442695
          %v704 = vpow.pop %v703
          %v705 = vadd.f32 %v704, 1.0
          %v706 = vrcp.pop %v705
          %v707 = vmul.f32 1.0, %v706
          %v708 = vld [vmem:[%s389] sm:$0xff]
          %v710 = vsel %vm541, %v697, 0
          %712 = vmatprep.subr.mxu0 0.0
          %713 = vmatpush1.msra.mxu0 0.0
          %714 = vmatprep.subr.mxu0 0.0
          %715 = vmatpush1.msra.mxu0 0.0
          %716 = vmatprep.subr.mxu0 0.0
          %717 = vmatpush1.msra.mxu0 0.0
          %718 = vmatprep.subr.mxu0 0.0
          %719 = vmatpush1.msra.mxu0 0.0
          %720 = vmatprep.subr.mxu0 0.0
          %721 = vmatpush1.msra.mxu0 0.0
          %722 = vmatprep.subr.mxu0 0.0
          %723 = vmatpush1.msra.mxu0 0.0
          %724 = vmatprep.subr.mxu0 0.0
          %725 = vmatpush1.msra.mxu0 0.0
          %726 = vmatprep.subr.mxu0 0.0
          %727 = vmatpush1.msra.mxu0 0.0
          %728 = vmatprep.subr.mxu0 0.0
          %729 = vmatpush1.msra.mxu0 0.0
          %730 = vmatprep.subr.mxu0 0.0
          %731 = vmatpush1.msra.mxu0 0.0
          %732 = vmatprep.subr.mxu0 0.0
          %733 = vmatpush1.msra.mxu0 0.0
          %734 = vmatprep.subr.mxu0 0.0
          %735 = vmatpush1.msra.mxu0 0.0
          %736 = vmatprep.subr.mxu0 0.0
          %737 = vmatpush1.msra.mxu0 0.0
          %738 = vmatprep.subr.mxu0 0.0
          %739 = vmatpush1.msra.mxu0 0.0
          %740 = vmatprep.subr.mxu0 0.0
          %741 = vmatpush1.msra.mxu0 0.0
          %742 = vmatprep.subr.mxu0 0.0
          %743 = vmatpush1.msra.mxu0 %v708
          %744 = vmatprep.subr.mxu0 0.0
          %745 = vmatpush2.msra.mxu0 0.0
          %746 = vmatprep.subr.mxu0 0.0
          %747 = vmatpush2.msra.mxu0 0.0
          %748 = vmatprep.subr.mxu0 0.0
          %749 = vmatpush2.msra.mxu0 0.0
          %750 = vmatprep.subr.mxu0 0.0
          %751 = vmatpush2.msra.mxu0 0.0
          %752 = vmatprep.subr.mxu0 0.0
          %753 = vmatpush2.msra.mxu0 0.0
          %754 = vmatprep.subr.mxu0 0.0
          %755 = vmatpush2.msra.mxu0 0.0
          %756 = vmatprep.subr.mxu0 0.0
          %757 = vmatpush2.msra.mxu0 0.0
          %758 = vmatprep.subr.mxu0 0.0
          %759 = vmatpush2.msra.mxu0 0.0
          %760 = vmatprep.subr.mxu0 0.0
          %761 = vmatpush2.msra.mxu0 0.0
          %762 = vmatprep.subr.mxu0 0.0
          %763 = vmatpush2.msra.mxu0 0.0
          %764 = vmatprep.subr.mxu0 0.0
          %765 = vmatpush2.msra.mxu0 0.0
          %766 = vmatprep.subr.mxu0 0.0
          %767 = vmatpush2.msra.mxu0 0.0
          %768 = vmatprep.subr.mxu0 0.0
          %769 = vmatpush2.msra.mxu0 0.0
          %770 = vmatprep.subr.mxu0 0.0
          %771 = vmatpush2.msra.mxu0 0.0
          %772 = vmatprep.subr.mxu0 0.0
          %773 = vmatpush2.msra.mxu0 0.0
          %774 = vmatprep.subr.mxu0 0.0
          %775 = vmatpush2.msra.mxu0 0.0
          %776 = vmatprep.mubr.f32.mxu0 0.0
          %777 = vmatmul.mubr.f32.gmra.mxu0 %v710
          %v778 = vpop.f32.mrf.mxu0
          %v779 = vadd.f32 0.0, %v778
          %v780 = vpop.f32.mrf.mxu0
          %781 = vdwg.mxu0
          %v782 = vld [vmem:[#allocation3] sm:$0x1]
          %v783 = vmul.f32 %v782, %v697
          %v784 = vsel %vm639, %v783, 0.0
          %785 = vadd.xlane.f32.xlu0 %v784
          %v786 = vpop.xlane.xlu0 %785
          %v787 = vmax.f32 %v786, 1.0
          %789 = vrot.lane.b32.xlu0 %v779, 8
          %v790 = vpop.permute.xlu0 %789
          %v792 = vmul.f32 %v707, %v790
          %v793 = vrcp.pop %v787
          %v794 = vmul.f32 %v792, %v793
          %796 = vrot.lane.b32.xlu0 %v794, 120
          %v797 = vpop.permute.xlu0 %796
          %799 = vst.msk [vmem:[%s382] sm:$0x1] %vm639, %v797
        $region52: #{xlstm_pallas.1} parent=43 // pred_fallthru
          _
        %s800 = sand.u32 %s216, 1
        %s801 = scalar_lea.sflag [#allocation5], %s800
        %s802 = sand.u32 %s216, 1
        %s803 = scalar_lea.vmem [#allocation4], %s802
        %s804 = sand.u32 %s244, 1
        %s805 = scalar_lea.sflag [#allocation7], %s804
        %s806 = sand.u32 %s244, 1
        %s807 = smul.addr %s806, 8
        %s808 = scalar_lea.vmem [#allocation6], %s807
        // Predicated region
        $region53: #{xlstm_pallas.1} parent=43 // pred_check
          %p809 = pneg %p226
        $region54: #{xlstm_pallas.1} parent=43 // pred_check_branch
          %811 = sbr.rel (%p809) target = $region56
        $region55: #{xlstm_pallas.1} parent=43 // pred_region
          %s813 = ssub.s32 16, 16
          %814 = vsyncadd %s801, %s813
          %s815 = smul.addr %s30, 4
          %s816 = sadd.s32 %s31, %s815
          %s817 = smul.addr %s816, 16
          %s818 = scalar_lea.hbm %s6, %s817
          %s820 = sshll.u32 %s803, 4
          %s821 = int_to_ptr.vmem [resolvable:$true] %s820
          %823 = dma.vmem_to_hbm [thread:$0]  %s821, 16, %s818, %s801
        $region56: #{xlstm_pallas.1} parent=43 // pred_fallthru
          _
        // Predicated region
        $region57: #{xlstm_pallas.1} parent=43 // pred_check
          %p824 = pneg %p254
        $region58: #{xlstm_pallas.1} parent=43 // pred_check_branch
          %826 = sbr.rel (%p824) target = $region60
        $region59: #{xlstm_pallas.1} parent=43 // pred_region
          %s828 = ssub.s32 128, 128
          %829 = vsyncadd %s805, %s828
          %s830 = smul.addr %s30, 4
          %s831 = sadd.s32 %s31, %s830
          %s832 = smul.addr %s831, 128
          %s833 = scalar_lea.hbm %s7, %s832
          %s835 = sshll.u32 %s808, 4
          %s836 = int_to_ptr.vmem [resolvable:$true] %s835
          %838 = dma.vmem_to_hbm [thread:$0]  %s836, 128, %s833, %s805
        $region60: #{xlstm_pallas.1} parent=43 // pred_fallthru
          _
      $region44: #{xlstm_pallas.1} parent=5 // pred_fallthru
        _
      %p839 = scmp.le.s32.totalorder 2, %s20
      // Predicated region
      $region61: #{xlstm_pallas.1} parent=5 // pred_check
        %p840 = pneg %p839
      $region62: #{xlstm_pallas.1} parent=5 // pred_check_branch
        %842 = sbr.rel (%p840) target = $region64
      $region63: #{xlstm_pallas.1} parent=5 // pred_region
        %s843 = ssub.s32 %s20, 2
        // Predicated region
        $region65: #{xlstm_pallas.1} parent=63 // pred_check
          %p844 = pneg %p232
        $region66: #{xlstm_pallas.1} parent=63 // pred_check_branch
          %846 = sbr.rel (%p844) target = $region68
        $region67: #{xlstm_pallas.1} parent=63 // pred_region
          %s847 = sand.u32 %s217, 1
          %s848 = scalar_lea.sflag [#allocation5], %s847
          %s849 = sand.u32 %s217, 1
          %s850 = scalar_lea.vmem [#allocation4], %s849
          %851 = dma.done %s848, 16
        $region68: #{xlstm_pallas.1} parent=63 // pred_fallthru
          _
        // Predicated region
        $region69: #{xlstm_pallas.1} parent=63 // pred_check
          %p852 = pneg %p260
        $region70: #{xlstm_pallas.1} parent=63 // pred_check_branch
          %854 = sbr.rel (%p852) target = $region72
        $region71: #{xlstm_pallas.1} parent=63 // pred_region
          %s855 = sand.u32 %s245, 1
          %s856 = scalar_lea.sflag [#allocation7], %s855
          %s857 = sand.u32 %s245, 1
          %s858 = smul.addr %s857, 8
          %s859 = scalar_lea.vmem [#allocation6], %s858
          %860 = dma.done %s856, 128
        $region72: #{xlstm_pallas.1} parent=63 // pred_fallthru
          _
      $region64: #{xlstm_pallas.1} parent=5 // pred_fallthru
        _
    $region6: #{xlstm_pallas.1} parent=1 // loop_footer
      %s24 = sadd.s32 1, %s20
    $region7: #{xlstm_pallas.1} parent=1 // loop_footer_branch
      %19 = sbr.rel target = $region3
    $region8: #{xlstm_pallas.1} parent=1 // loop_exit
      _
    %861 = vsyncpa [#allocation5], 1
    %s862 = scalar_lea.sflag [#allocation5], 1
    %863 = vsyncpa %s862, 1
    %864 = vsyncpa [#allocation7], 1
    %s865 = scalar_lea.sflag [#allocation7], 1
    %866 = vsyncpa %s865, 1

</llo_original>
